<compile_context>
chip_gen: v6e
topology: v6e:2x2x1
jax: 0.10.0
libtpu: 0.0.40
codegen_flags: <defaults>
</compile_context>

<pallas_src>
import math

import jax
import jax.numpy as jnp
from jax import lax
from jax.experimental import pallas as pl
from jax.experimental.pallas import tpu as pltpu


def _make_kernel(H, W, RB):
    """Kernel body for one (RB, W) block, RB = TB*H rows = TB whole slices."""

    def kernel(x_ref, t_ref, out_ref):
        x = x_ref[...].astype(jnp.float32)   # (RB, W)
        t = t_ref[...].astype(jnp.float32)
        d = x - t

        # --- MSE term: sum of squared errors over the block. -----------------
        s_sq = jnp.sum(d * d)

        # --- diff(axis=-1): adjacent-column differences. ----------------------
        # Rows are independent, so no masking is needed.
        if W > 1:
            di = d[:, 1:] - d[:, :-1]
            s_gi = jnp.sum(di * di)
        else:
            s_gi = jnp.float32(0.0)

        # --- diff(axis=-2): adjacent-row differences inside each slice. -------
        # In the flattened (TB*H, W) layout, rows r with r % H == H-1 are the
        # last row of a slice; the (r, r+1) pair crosses a slice (N/C)
        # boundary and is masked out.  Zero-padded slices contribute nothing.
        if H > 1:
            dj = d[1:, :] - d[:-1, :]
            rowm = lax.broadcasted_iota(jnp.int32, (RB - 1, W), 0)
            gj = jnp.where(rowm % H < H - 1, dj, 0.0)
            s_gj = jnp.sum(gj * gj)
        else:
            s_gj = jnp.float32(0.0)

        # --- Emit per-block partials into a lane-dense (8, 128) tile. ---------
        # [0,0] = sum sq-err, [0,1] = sum diff-i^2, [0,2] = sum diff-j^2,
        # zeros elsewhere, so the wrapper can simply sum over all blocks/rows.
        lane = lax.broadcasted_iota(jnp.int32, (8, 128), 1)
        sub = lax.broadcasted_iota(jnp.int32, (8, 128), 0)
        first_row = sub == 0
        tile = jnp.where(
            first_row & (lane == 0), s_sq,
            jnp.where(
                first_row & (lane == 1), s_gi,
                jnp.where(first_row & (lane == 2), s_gj, jnp.float32(0.0)),
            ),
        )
        out_ref[0] = tile

    return kernel


def mse_and_gdl(inputs, targets, lambda_mse, lambda_gdl,
                *, block_elems=2 * 1024 * 1024):
    """Pallas equivalent of MSE_and_GDL.forward.

    inputs/targets: (N, C, H, W) arrays (NCHW, same as the PyTorch module).
    lambda_mse / lambda_gdl: python or 0-d scalars.
    block_elems: target elements per input block (~8 MiB of f32 by default,
                 i.e. ~32 MiB live with double-buffered inputs).
    Returns a scalar float32 loss.
    """
    assert inputs.shape == targets.shape
    N, C, H, W = inputs.shape
    B = N * C
    total_elems = N * C * H * W

    # Slices-per-block granule so the block's sublane extent (TB*H) is a
    # multiple of 8, as required by the (8, 128) BlockSpec tiling rule.
    granule = 8 // math.gcd(H, 8)
    tb = max(1, block_elems // (H * W))                 # target slices/block
    tb = max(granule, (tb // granule) * granule)        # round to granule
    b_ceil = ((B + granule - 1) // granule) * granule
    tb = min(tb, b_ceil)                                # don't exceed batch
    # TODO(synk): a single (H, W) slice larger than the per-block VMEM budget
    # would need an extra H-tiling grid axis with a one-row carry for the
    # vertical diff; not needed for typical image sizes.

    num_blocks = -(-B // tb)            # ceil(B / tb)
    b_pad = num_blocks * tb
    RB = tb * H                         # rows per block (multiple of 8)

    x2 = inputs.reshape(B * H, W)
    t2 = targets.reshape(B * H, W)
    pad_rows = (b_pad - B) * H
    if pad_rows:
        # Zero-padded slices are exact: d == 0 there and the seam into them
        # is masked, so they contribute nothing to any term.
        x2 = jnp.pad(x2, ((0, pad_rows), (0, 0)))
        t2 = jnp.pad(t2, ((0, pad_rows), (0, 0)))

    partials = pl.pallas_call(
        _make_kernel(H, W, RB),
        out_shape=jax.ShapeDtypeStruct((num_blocks, 8, 128), jnp.float32),
        grid=(num_blocks,),
        in_specs=[
            pl.BlockSpec((RB, W), lambda g: (g, 0)),    # inputs block
            pl.BlockSpec((RB, W), lambda g: (g, 0)),    # targets block
        ],
        out_specs=pl.BlockSpec((1, 8, 128), lambda g: (g, 0, 0)),
        compiler_params=pltpu.CompilerParams(
            dimension_semantics=("parallel",),          # independent blocks
            vmem_limit_bytes=48 * 1024 * 1024,
        ),
    )(x2, t2)

    # Tiny final reduction + weighting + normalization in plain XLA.
    sums = partials.sum(axis=(0, 1))                    # (128,)
    loss = (lambda_mse * sums[0]
            + lambda_gdl * (sums[1] + sums[2])) / total_elems
    return loss


def _reference(inputs, targets, lambda_mse, lambda_gdl):
    d = inputs - targets
    se = jnp.sum(d * d)
    di = jnp.diff(inputs, axis=-1) - jnp.diff(targets, axis=-1)
    dj = jnp.diff(inputs, axis=-2) - jnp.diff(targets, axis=-2)
    return (lambda_mse * se + lambda_gdl * jnp.sum(di * di)
            + lambda_gdl * jnp.sum(dj * dj)) / inputs.size


if __name__ == "__main__":
    key = jax.random.PRNGKey(0)
    k1, k2 = jax.random.split(key)

    N, C, H, W = 2, 4, 16, 16
    inputs = jax.random.normal(k1, (N, C, H, W), dtype=jnp.float32)
    targets = jax.random.normal(k2, (N, C, H, W), dtype=jnp.float32)
    lambda_mse = 1.0
    lambda_gdl = 0.5

    ref = _reference(inputs, targets, lambda_mse, lambda_gdl)

    # Default (single-block) path.
    loss = jax.block_until_ready(
        mse_and_gdl(inputs, targets, lambda_mse, lambda_gdl))
    assert jnp.allclose(loss, ref, rtol=1e-5, atol=1e-5), (loss, ref)

    # Multi-block + batch-padding path (3 slices per block over 8 slices
    # -> 3 grid steps, one zero-padded slice).
    loss2 = jax.block_until_ready(
        mse_and_gdl(inputs, targets, lambda_mse, lambda_gdl,
                    block_elems=3 * H * W))
    assert jnp.allclose(loss2, ref, rtol=1e-5, atol=1e-5), (loss2, ref)

    print("KERNEL_OK")
</pallas_src>

<mosaic_0001>
module attributes {stable_mosaic.version = 11 : i64} {
  func.func @kernel(%arg0: i32, %arg1: memref<128x16xf32, #tpu.memory_space<vmem>>, %arg2: memref<128x16xf32, #tpu.memory_space<vmem>>, %arg3: memref<1x8x128xf32, #tpu.memory_space<vmem>>) attributes {dimension_semantics = [#tpu.dimension_semantics<parallel>], iteration_bounds = array<i64: 1>, scalar_prefetch = 0 : i64, scratch_operands = 0 : i64, tpu.core_type = #tpu.core_type<tc>, window_params = [{transform_indices = @transform_0, window_bounds = array<i64: 128, 16>}, {transform_indices = @transform_1, window_bounds = array<i64: 128, 16>}, {transform_indices = @transform_2, window_bounds = array<i64: 1, 8, 128>}]} {
    %c0 = arith.constant 0 : index
    %c0_0 = arith.constant 0 : index
    %0 = vector.load %arg1[%c0, %c0_0] : memref<128x16xf32, #tpu.memory_space<vmem>>, vector<128x16xf32>
    %c0_1 = arith.constant 0 : index
    %c0_2 = arith.constant 0 : index
    %1 = vector.load %arg2[%c0_1, %c0_2] : memref<128x16xf32, #tpu.memory_space<vmem>>, vector<128x16xf32>
    %2 = arith.subf %0, %1 : vector<128x16xf32>
    %3 = arith.mulf %2, %2 : vector<128x16xf32>
    %4 = vector.shape_cast %3 : vector<128x16xf32> to vector<1x128x16xf32>
    %cst = arith.constant dense<0.000000e+00> : vector<1xf32>
    %5 = vector.multi_reduction <add>, %4, %cst [1, 2] : vector<1x128x16xf32> to vector<1xf32>
    %6 = vector.shape_cast %5 : vector<1xf32> to vector<1x1x1xf32>
    %7 = vector.extract %6[0, 0, 0] : f32 from vector<1x1x1xf32>
    %8 = vector.extract_strided_slice %2 {offsets = [0, 1], sizes = [128, 15], strides = [1, 1]} : vector<128x16xf32> to vector<128x15xf32>
    %9 = vector.extract_strided_slice %2 {offsets = [0, 0], sizes = [128, 15], strides = [1, 1]} : vector<128x16xf32> to vector<128x15xf32>
    %10 = arith.subf %8, %9 : vector<128x15xf32>
    %11 = arith.mulf %10, %10 : vector<128x15xf32>
    %12 = vector.shape_cast %11 : vector<128x15xf32> to vector<1x128x15xf32>
    %cst_3 = arith.constant dense<0.000000e+00> : vector<1xf32>
    %13 = vector.multi_reduction <add>, %12, %cst_3 [1, 2] : vector<1x128x15xf32> to vector<1xf32>
    %14 = vector.shape_cast %13 : vector<1xf32> to vector<1x1x1xf32>
    %15 = vector.extract %14[0, 0, 0] : f32 from vector<1x1x1xf32>
    %16 = vector.extract_strided_slice %2 {offsets = [1, 0], sizes = [127, 16], strides = [1, 1]} : vector<128x16xf32> to vector<127x16xf32>
    %17 = vector.extract_strided_slice %2 {offsets = [0, 0], sizes = [127, 16], strides = [1, 1]} : vector<128x16xf32> to vector<127x16xf32>
    %18 = arith.subf %16, %17 : vector<127x16xf32>
    %19 = tpu.iota {dimensions = array<i32: 0>} : vector<127x16xi32>
    %c16_i32 = arith.constant 16 : i32
    %c0_i32 = arith.constant 0 : i32
    %20 = arith.cmpi eq, %c16_i32, %c0_i32 : i32
    %c1_i32 = arith.constant 1 : i32
    %21 = arith.select %20, %c1_i32, %c16_i32 : i32
    %22 = vector.broadcast %21 : i32 to vector<127x16xi32>
    %23 = arith.remsi %19, %22 : vector<127x16xi32>
    %c0_i32_4 = arith.constant 0 : i32
    %24 = vector.broadcast %c0_i32_4 : i32 to vector<127x16xi32>
    %25 = arith.cmpi ne, %23, %24 : vector<127x16xi32>
    %c0_i32_5 = arith.constant 0 : i32
    %26 = vector.broadcast %c0_i32_5 : i32 to vector<127x16xi32>
    %27 = arith.cmpi slt, %23, %26 : vector<127x16xi32>
    %c0_i32_6 = arith.constant 0 : i32
    %28 = arith.cmpi slt, %21, %c0_i32_6 : i32
    %29 = vector.broadcast %28 : i1 to vector<127x16xi1>
    %30 = vector.broadcast %29 : vector<127x16xi1> to vector<127x16xi1>
    %31 = arith.xori %27, %30 : vector<127x16xi1>
    %32 = arith.andi %31, %25 : vector<127x16xi1>
    %33 = vector.broadcast %21 : i32 to vector<127x16xi32>
    %34 = arith.addi %23, %33 : vector<127x16xi32>
    %35 = arith.select %32, %34, %23 : vector<127x16xi1>, vector<127x16xi32>
    %c15_i32 = arith.constant 15 : i32
    %36 = vector.broadcast %c15_i32 : i32 to vector<127x16xi32>
    %37 = arith.cmpi slt, %35, %36 : vector<127x16xi32>
    %cst_7 = arith.constant 0.000000e+00 : f32
    %38 = vector.broadcast %cst_7 : f32 to vector<127x16xf32>
    %39 = arith.select %37, %18, %38 : vector<127x16xi1>, vector<127x16xf32>
    %40 = arith.mulf %39, %39 : vector<127x16xf32>
    %41 = vector.shape_cast %40 : vector<127x16xf32> to vector<1x127x16xf32>
    %cst_8 = arith.constant dense<0.000000e+00> : vector<1xf32>
    %42 = vector.multi_reduction <add>, %41, %cst_8 [1, 2] : vector<1x127x16xf32> to vector<1xf32>
    %43 = vector.shape_cast %42 : vector<1xf32> to vector<1x1x1xf32>
    %44 = vector.extract %43[0, 0, 0] : f32 from vector<1x1x1xf32>
    %45 = tpu.iota {dimensions = array<i32: 1>} : vector<8x128xi32>
    %46 = tpu.iota {dimensions = array<i32: 0>} : vector<8x128xi32>
    %c0_i32_9 = arith.constant 0 : i32
    %47 = vector.broadcast %c0_i32_9 : i32 to vector<8x128xi32>
    %48 = arith.cmpi eq, %46, %47 : vector<8x128xi32>
    %c0_i32_10 = arith.constant 0 : i32
    %49 = vector.broadcast %c0_i32_10 : i32 to vector<8x128xi32>
    %50 = arith.cmpi eq, %45, %49 : vector<8x128xi32>
    %51 = arith.andi %48, %50 : vector<8x128xi1>
    %c1_i32_11 = arith.constant 1 : i32
    %52 = vector.broadcast %c1_i32_11 : i32 to vector<8x128xi32>
    %53 = arith.cmpi eq, %45, %52 : vector<8x128xi32>
    %54 = arith.andi %48, %53 : vector<8x128xi1>
    %c2_i32 = arith.constant 2 : i32
    %55 = vector.broadcast %c2_i32 : i32 to vector<8x128xi32>
    %56 = arith.cmpi eq, %45, %55 : vector<8x128xi32>
    %57 = arith.andi %48, %56 : vector<8x128xi1>
    %cst_12 = arith.constant 0.000000e+00 : f32
    %58 = vector.broadcast %44 : f32 to vector<8x128xf32>
    %59 = vector.broadcast %cst_12 : f32 to vector<8x128xf32>
    %60 = arith.select %57, %58, %59 : vector<8x128xi1>, vector<8x128xf32>
    %61 = vector.broadcast %15 : f32 to vector<8x128xf32>
    %62 = arith.select %54, %61, %60 : vector<8x128xi1>, vector<8x128xf32>
    %63 = vector.broadcast %7 : f32 to vector<8x128xf32>
    %64 = arith.select %51, %63, %62 : vector<8x128xi1>, vector<8x128xf32>
    %c0_13 = arith.constant 0 : index
    %c0_14 = arith.constant 0 : index
    %c0_15 = arith.constant 0 : index
    %65 = vector.load %arg3[%c0_13, %c0_14, %c0_15] : memref<1x8x128xf32, #tpu.memory_space<vmem>>, vector<1x8x128xf32>
    %66 = vector.shape_cast %65 : vector<1x8x128xf32> to vector<8x128xf32>
    %67 = vector.shape_cast %64 : vector<8x128xf32> to vector<1x8x128xf32>
    tpu.vector_store %arg3[%c0_13, %c0_14, %c0_15], %67 {strides = array<i32>} : memref<1x8x128xf32, #tpu.memory_space<vmem>>, vector<1x8x128xf32>,
    return
  }
  func.func @transform_0(%arg0: i32) -> (i32, i32) {
    %c0_i32 = arith.constant 0 : i32
    %c0_i32_0 = arith.constant 0 : i32
    return %arg0, %c0_i32 : i32, i32
  }
  func.func @transform_1(%arg0: i32) -> (i32, i32) {
    %c0_i32 = arith.constant 0 : i32
    %c0_i32_0 = arith.constant 0 : i32
    return %arg0, %c0_i32 : i32, i32
  }
  func.func @transform_2(%arg0: i32) -> (i32, i32, i32) {
    %c0_i32 = arith.constant 0 : i32
    %c0_i32_0 = arith.constant 0 : i32
    %c0_i32_1 = arith.constant 0 : i32
    return %arg0, %c0_i32, %c0_i32_0 : i32, i32, i32
  }
}

</mosaic_0001>

<llo_original>
// kernel: tpu_custom_call.1
$region0: #{tpu_custom_call.1}
  #allocation0 [shape = 'u32[]', space=smem, size = 0x4, offset = 0x4, fixed_abs, tag = 'smem constant byte address 0x4 - core index']
  #allocation1 [shape = 'u32[144,128]{1,0:T(1,128)}', space=vmem, size = 0x12000, scoped, tag = 'internal scratch']
  %s0 = inlined_call_operand.vmem [shape: f32[128,16], index: 0, kind: input, shape index: {}]
  %s1 = inlined_call_operand.vmem [shape: f32[128,16], index: 1, kind: input, shape index: {}]
  %s2 = inlined_call_operand.hbm [shape: f32[1,8,128], index: 2, kind: output, shape index: {}]
  %s3 = sld [smem:[#allocation0]]
  $region18: #{tpu_custom_call.1} parent=0
    _
  %s5 = ssub.s32 1, %s3
  %s6 = scalar_select 0, %s5, %s3
  $region1: #{tpu_custom_call.1} parent=0
    #allocation2 [shape = 'u8[4096]{0}', space=vmem, size = 0x1000, scoped, tag = 'output window, operand 0, single buffered']
    #allocation3 [shape = 's32[1]{0}', space=sflag, size = 0x4, scoped, tag = 'scoped memory for tpu_custom_call.1']
    %7 = vsyncpa [#allocation3], 0
    // Predicated region
    $region2: #{tpu_custom_call.1} parent=1 // pred_check
      _
    $region3: #{tpu_custom_call.1} parent=1 // pred_check_branch
      %9 = sbr.rel (0) target = $region5
    $region4: #{tpu_custom_call.1} parent=1 // pred_region
      _
    $region5: #{tpu_custom_call.1} parent=1 // pred_fallthru
      _
    // Predicated region
    $region6: #{tpu_custom_call.1} parent=1 // pred_check
      _
    $region7: #{tpu_custom_call.1} parent=1 // pred_check_branch
      %11 = sbr.rel (0) target = $region9
    $region8: #{tpu_custom_call.1} parent=1 // pred_region
      _
    $region9: #{tpu_custom_call.1} parent=1 // pred_fallthru
      _
    %v12 = vld [vmem:[%s0] sm:$0xff]
    %v13 = vld [vmem:[%s0 + $0x8] sm:$0xff]
    %v14 = vld [vmem:[%s0 + $0x10] sm:$0xff]
    %v15 = vld [vmem:[%s0 + $0x18] sm:$0xff]
    %v16 = vld [vmem:[%s0 + $0x20] sm:$0xff]
    %v17 = vld [vmem:[%s0 + $0x28] sm:$0xff]
    %v18 = vld [vmem:[%s0 + $0x30] sm:$0xff]
    %v19 = vld [vmem:[%s0 + $0x38] sm:$0xff]
    %v20 = vld [vmem:[%s0 + $0x40] sm:$0xff]
    %v21 = vld [vmem:[%s0 + $0x48] sm:$0xff]
    %v22 = vld [vmem:[%s0 + $0x50] sm:$0xff]
    %v23 = vld [vmem:[%s0 + $0x58] sm:$0xff]
    %v24 = vld [vmem:[%s0 + $0x60] sm:$0xff]
    %v25 = vld [vmem:[%s0 + $0x68] sm:$0xff]
    %v26 = vld [vmem:[%s0 + $0x70] sm:$0xff]
    %v27 = vld [vmem:[%s0 + $0x78] sm:$0xff]
    %v28 = vld [vmem:[%s1] sm:$0xff]
    %v29 = vld [vmem:[%s1 + $0x8] sm:$0xff]
    %v30 = vld [vmem:[%s1 + $0x10] sm:$0xff]
    %v31 = vld [vmem:[%s1 + $0x18] sm:$0xff]
    %v32 = vld [vmem:[%s1 + $0x20] sm:$0xff]
    %v33 = vld [vmem:[%s1 + $0x28] sm:$0xff]
    %v34 = vld [vmem:[%s1 + $0x30] sm:$0xff]
    %v35 = vld [vmem:[%s1 + $0x38] sm:$0xff]
    %v36 = vld [vmem:[%s1 + $0x40] sm:$0xff]
    %v37 = vld [vmem:[%s1 + $0x48] sm:$0xff]
    %v38 = vld [vmem:[%s1 + $0x50] sm:$0xff]
    %v39 = vld [vmem:[%s1 + $0x58] sm:$0xff]
    %v40 = vld [vmem:[%s1 + $0x60] sm:$0xff]
    %v41 = vld [vmem:[%s1 + $0x68] sm:$0xff]
    %v42 = vld [vmem:[%s1 + $0x70] sm:$0xff]
    %v43 = vld [vmem:[%s1 + $0x78] sm:$0xff]
    %v44 = vsub.f32 %v12, %v28
    %v45 = vsub.f32 %v13, %v29
    %v46 = vsub.f32 %v14, %v30
    %v47 = vsub.f32 %v15, %v31
    %v48 = vsub.f32 %v16, %v32
    %v49 = vsub.f32 %v17, %v33
    %v50 = vsub.f32 %v18, %v34
    %v51 = vsub.f32 %v19, %v35
    %v52 = vsub.f32 %v20, %v36
    %v53 = vsub.f32 %v21, %v37
    %v54 = vsub.f32 %v22, %v38
    %v55 = vsub.f32 %v23, %v39
    %v56 = vsub.f32 %v24, %v40
    %v57 = vsub.f32 %v25, %v41
    %v58 = vsub.f32 %v26, %v42
    %v59 = vsub.f32 %v27, %v43
    %v60 = vmul.f32 %v44, %v44
    %v61 = vmul.f32 %v45, %v45
    %v62 = vmul.f32 %v46, %v46
    %v63 = vmul.f32 %v47, %v47
    %v64 = vmul.f32 %v48, %v48
    %v65 = vmul.f32 %v49, %v49
    %v66 = vmul.f32 %v50, %v50
    %v67 = vmul.f32 %v51, %v51
    %v68 = vmul.f32 %v52, %v52
    %v69 = vmul.f32 %v53, %v53
    %v70 = vmul.f32 %v54, %v54
    %v71 = vmul.f32 %v55, %v55
    %v72 = vmul.f32 %v56, %v56
    %v73 = vmul.f32 %v57, %v57
    %v74 = vmul.f32 %v58, %v58
    %v75 = vmul.f32 %v59, %v59
    %vm76 = vcmask 130048
    %v77 = vsel %vm76, %v60, 0.0
    %v78 = vsel %vm76, %v61, 0.0
    %v79 = vadd.f32 %v77, %v78
    %v80 = vsel %vm76, %v62, 0.0
    %v81 = vadd.f32 %v79, %v80
    %v82 = vsel %vm76, %v63, 0.0
    %v83 = vadd.f32 %v81, %v82
    %v84 = vsel %vm76, %v64, 0.0
    %v85 = vadd.f32 %v83, %v84
    %v86 = vsel %vm76, %v65, 0.0
    %v87 = vadd.f32 %v85, %v86
    %v88 = vsel %vm76, %v66, 0.0
    %v89 = vadd.f32 %v87, %v88
    %v90 = vsel %vm76, %v67, 0.0
    %v91 = vadd.f32 %v89, %v90
    %v92 = vsel %vm76, %v68, 0.0
    %v93 = vadd.f32 %v91, %v92
    %v94 = vsel %vm76, %v69, 0.0
    %v95 = vadd.f32 %v93, %v94
    %v96 = vsel %vm76, %v70, 0.0
    %v97 = vadd.f32 %v95, %v96
    %v98 = vsel %vm76, %v71, 0.0
    %v99 = vadd.f32 %v97, %v98
    %v100 = vsel %vm76, %v72, 0.0
    %v101 = vadd.f32 %v99, %v100
    %v102 = vsel %vm76, %v73, 0.0
    %v103 = vadd.f32 %v101, %v102
    %v104 = vsel %vm76, %v74, 0.0
    %v105 = vadd.f32 %v103, %v104
    %v106 = vsel %vm76, %v75, 0.0
    %v107 = vadd.f32 %v105, %v106
    %108 = vadd.xlane.f32.xlu0 %v107
    %v109 = vpop.xlane.xlu0 %108
    %v110 = vrot.slane %v109, 4
    %v111 = vadd.f32 %v109, %v110
    %v112 = vrot.slane %v111, 2
    %v113 = vadd.f32 %v111, %v112
    %v114 = vrot.slane %v113, 1
    %v115 = vadd.f32 %v113, %v114
    %s116 = vtos %v115
    %133 = vrot.lane.b32.xlu0 %v44, 1
    %v134 = vpop.permute.xlu0 %133
    %135 = vrot.lane.b32.xlu0 %v45, 1
    %v136 = vpop.permute.xlu0 %135
    %137 = vrot.lane.b32.xlu0 %v46, 1
    %v138 = vpop.permute.xlu0 %137
    %139 = vrot.lane.b32.xlu0 %v47, 1
    %v140 = vpop.permute.xlu0 %139
    %141 = vrot.lane.b32.xlu0 %v48, 1
    %v142 = vpop.permute.xlu0 %141
    %143 = vrot.lane.b32.xlu0 %v49, 1
    %v144 = vpop.permute.xlu0 %143
    %145 = vrot.lane.b32.xlu0 %v50, 1
    %v146 = vpop.permute.xlu0 %145
    %147 = vrot.lane.b32.xlu0 %v51, 1
    %v148 = vpop.permute.xlu0 %147
    %149 = vrot.lane.b32.xlu0 %v52, 1
    %v150 = vpop.permute.xlu0 %149
    %151 = vrot.lane.b32.xlu0 %v53, 1
    %v152 = vpop.permute.xlu0 %151
    %153 = vrot.lane.b32.xlu0 %v54, 1
    %v154 = vpop.permute.xlu0 %153
    %155 = vrot.lane.b32.xlu0 %v55, 1
    %v156 = vpop.permute.xlu0 %155
    %157 = vrot.lane.b32.xlu0 %v56, 1
    %v158 = vpop.permute.xlu0 %157
    %159 = vrot.lane.b32.xlu0 %v57, 1
    %v160 = vpop.permute.xlu0 %159
    %161 = vrot.lane.b32.xlu0 %v58, 1
    %v162 = vpop.permute.xlu0 %161
    %163 = vrot.lane.b32.xlu0 %v59, 1
    %v164 = vpop.permute.xlu0 %163
    %v181 = vsub.f32 %v44, %v134
    %v182 = vsub.f32 %v45, %v136
    %v183 = vsub.f32 %v46, %v138
    %v184 = vsub.f32 %v47, %v140
    %v185 = vsub.f32 %v48, %v142
    %v186 = vsub.f32 %v49, %v144
    %v187 = vsub.f32 %v50, %v146
    %v188 = vsub.f32 %v51, %v148
    %v189 = vsub.f32 %v52, %v150
    %v190 = vsub.f32 %v53, %v152
    %v191 = vsub.f32 %v54, %v154
    %v192 = vsub.f32 %v55, %v156
    %v193 = vsub.f32 %v56, %v158
    %v194 = vsub.f32 %v57, %v160
    %v195 = vsub.f32 %v58, %v162
    %v196 = vsub.f32 %v59, %v164
    %v197 = vmul.f32 %v181, %v181
    %v198 = vmul.f32 %v182, %v182
    %v199 = vmul.f32 %v183, %v183
    %v200 = vmul.f32 %v184, %v184
    %v201 = vmul.f32 %v185, %v185
    %v202 = vmul.f32 %v186, %v186
    %v203 = vmul.f32 %v187, %v187
    %v204 = vmul.f32 %v188, %v188
    %v205 = vmul.f32 %v189, %v189
    %v206 = vmul.f32 %v190, %v190
    %v207 = vmul.f32 %v191, %v191
    %v208 = vmul.f32 %v192, %v192
    %v209 = vmul.f32 %v193, %v193
    %v210 = vmul.f32 %v194, %v194
    %v211 = vmul.f32 %v195, %v195
    %v212 = vmul.f32 %v196, %v196
    %229 = vrot.lane.b32.xlu0 %v197, 127
    %v230 = vpop.permute.xlu0 %229
    %231 = vrot.lane.b32.xlu0 %v198, 127
    %v232 = vpop.permute.xlu0 %231
    %233 = vrot.lane.b32.xlu0 %v199, 127
    %v234 = vpop.permute.xlu0 %233
    %235 = vrot.lane.b32.xlu0 %v200, 127
    %v236 = vpop.permute.xlu0 %235
    %237 = vrot.lane.b32.xlu0 %v201, 127
    %v238 = vpop.permute.xlu0 %237
    %239 = vrot.lane.b32.xlu0 %v202, 127
    %v240 = vpop.permute.xlu0 %239
    %241 = vrot.lane.b32.xlu0 %v203, 127
    %v242 = vpop.permute.xlu0 %241
    %243 = vrot.lane.b32.xlu0 %v204, 127
    %v244 = vpop.permute.xlu0 %243
    %245 = vrot.lane.b32.xlu0 %v205, 127
    %v246 = vpop.permute.xlu0 %245
    %247 = vrot.lane.b32.xlu0 %v206, 127
    %v248 = vpop.permute.xlu0 %247
    %249 = vrot.lane.b32.xlu0 %v207, 127
    %v250 = vpop.permute.xlu0 %249
    %251 = vrot.lane.b32.xlu0 %v208, 127
    %v252 = vpop.permute.xlu0 %251
    %253 = vrot.lane.b32.xlu0 %v209, 127
    %v254 = vpop.permute.xlu0 %253
    %255 = vrot.lane.b32.xlu0 %v210, 127
    %v256 = vpop.permute.xlu0 %255
    %257 = vrot.lane.b32.xlu0 %v211, 127
    %v258 = vpop.permute.xlu0 %257
    %259 = vrot.lane.b32.xlu0 %v212, 127
    %v260 = vpop.permute.xlu0 %259
    %vm277 = vcmask 121856
    %v278 = vsel %vm277, %v230, 0.0
    %v279 = vsel %vm277, %v232, 0.0
    %v280 = vadd.f32 %v278, %v279
    %v281 = vsel %vm277, %v234, 0.0
    %v282 = vadd.f32 %v280, %v281
    %v283 = vsel %vm277, %v236, 0.0
    %v284 = vadd.f32 %v282, %v283
    %v285 = vsel %vm277, %v238, 0.0
    %v286 = vadd.f32 %v284, %v285
    %v287 = vsel %vm277, %v240, 0.0
    %v288 = vadd.f32 %v286, %v287
    %v289 = vsel %vm277, %v242, 0.0
    %v290 = vadd.f32 %v288, %v289
    %v291 = vsel %vm277, %v244, 0.0
    %v292 = vadd.f32 %v290, %v291
    %v293 = vsel %vm277, %v246, 0.0
    %v294 = vadd.f32 %v292, %v293
    %v295 = vsel %vm277, %v248, 0.0
    %v296 = vadd.f32 %v294, %v295
    %v297 = vsel %vm277, %v250, 0.0
    %v298 = vadd.f32 %v296, %v297
    %v299 = vsel %vm277, %v252, 0.0
    %v300 = vadd.f32 %v298, %v299
    %v301 = vsel %vm277, %v254, 0.0
    %v302 = vadd.f32 %v300, %v301
    %v303 = vsel %vm277, %v256, 0.0
    %v304 = vadd.f32 %v302, %v303
    %v305 = vsel %vm277, %v258, 0.0
    %v306 = vadd.f32 %v304, %v305
    %v307 = vsel %vm277, %v260, 0.0
    %v308 = vadd.f32 %v306, %v307
    %309 = vadd.xlane.f32.xlu0 %v308
    %v310 = vpop.xlane.xlu0 %309
    %v311 = vrot.slane %v310, 4
    %v312 = vadd.f32 %v310, %v311
    %v313 = vrot.slane %v312, 2
    %v314 = vadd.f32 %v312, %v313
    %v315 = vrot.slane %v314, 1
    %v316 = vadd.f32 %v314, %v315
    %s317 = vtos %v316
    %vm318 = vcmask 1040384
    %v319 = vrot.slane %v44, 7
    %v320 = vrot.slane %v45, 7
    %v321 = vsel %vm318, %v319, %v320
    %v322 = vrot.slane %v46, 7
    %v323 = vsel %vm318, %v320, %v322
    %v324 = vrot.slane %v47, 7
    %v325 = vsel %vm318, %v322, %v324
    %v326 = vrot.slane %v48, 7
    %v327 = vsel %vm318, %v324, %v326
    %v328 = vrot.slane %v49, 7
    %v329 = vsel %vm318, %v326, %v328
    %v330 = vrot.slane %v50, 7
    %v331 = vsel %vm318, %v328, %v330
    %v332 = vrot.slane %v51, 7
    %v333 = vsel %vm318, %v330, %v332
    %v334 = vrot.slane %v52, 7
    %v335 = vsel %vm318, %v332, %v334
    %v336 = vrot.slane %v53, 7
    %v337 = vsel %vm318, %v334, %v336
    %v338 = vrot.slane %v54, 7
    %v339 = vsel %vm318, %v336, %v338
    %v340 = vrot.slane %v55, 7
    %v341 = vsel %vm318, %v338, %v340
    %v342 = vrot.slane %v56, 7
    %v343 = vsel %vm318, %v340, %v342
    %v344 = vrot.slane %v57, 7
    %v345 = vsel %vm318, %v342, %v344
    %v346 = vrot.slane %v58, 7
    %v347 = vsel %vm318, %v344, %v346
    %v348 = vrot.slane %v59, 7
    %v349 = vsel %vm318, %v346, %v348
    %v366 = vsub.f32 %v44, %v319
    %v367 = vsub.f32 %v45, %v321
    %v368 = vsub.f32 %v46, %v323
    %v369 = vsub.f32 %v47, %v325
    %v370 = vsub.f32 %v48, %v327
    %v371 = vsub.f32 %v49, %v329
    %v372 = vsub.f32 %v50, %v331
    %v373 = vsub.f32 %v51, %v333
    %v374 = vsub.f32 %v52, %v335
    %v375 = vsub.f32 %v53, %v337
    %v376 = vsub.f32 %v54, %v339
    %v377 = vsub.f32 %v55, %v341
    %v378 = vsub.f32 %v56, %v343
    %v379 = vsub.f32 %v57, %v345
    %v380 = vsub.f32 %v58, %v347
    %v381 = vsub.f32 %v59, %v349
    %v382 = vlaneseq
    %v383 = vshrl.u32 %v382, 7
    %v384 = vadd.s32 %v383, 8
    %v385 = vadd.s32 %v383, 16
    %v386 = vadd.s32 %v383, 24
    %v387 = vadd.s32 %v383, 32
    %v388 = vadd.s32 %v383, 40
    %v389 = vadd.s32 %v383, 48
    %v390 = vadd.s32 %v383, 56
    %v391 = vadd.s32 %v383, 64
    %v392 = vadd.s32 %v383, 72
    %v393 = vadd.s32 %v383, 80
    %v394 = vadd.s32 %v383, 88
    %v395 = vadd.s32 %v383, 96
    %v396 = vadd.s32 %v383, 104
    %v397 = vadd.s32 %v383, 112
    %v398 = vadd.s32 %v383, 120
    %vm399 = vcmp.lt.s32.totalorder %v383, 0
    %v400 = vsub.s32 0, %v383
    %v401 = vsel %vm399, %v400, %v383
    %v402 = vshrl.u32 %v401, 4
    %v403 = vand.u32 %v401, 15
    %v404 = vsub.s32 0, %v403
    %v405 = vsel %vm399, %v404, %v403
    %vm406 = vcmp.lt.s32.totalorder %v384, 0
    %v407 = vsub.s32 0, %v384
    %v408 = vsel %vm406, %v407, %v384
    %v409 = vshrl.u32 %v408, 4
    %v410 = vand.u32 %v408, 15
    %v411 = vsub.s32 0, %v410
    %v412 = vsel %vm406, %v411, %v410
    %vm413 = vcmp.lt.s32.totalorder %v385, 0
    %v414 = vsub.s32 0, %v385
    %v415 = vsel %vm413, %v414, %v385
    %v416 = vshrl.u32 %v415, 4
    %v417 = vand.u32 %v415, 15
    %v418 = vsub.s32 0, %v417
    %v419 = vsel %vm413, %v418, %v417
    %vm420 = vcmp.lt.s32.totalorder %v386, 0
    %v421 = vsub.s32 0, %v386
    %v422 = vsel %vm420, %v421, %v386
    %v423 = vshrl.u32 %v422, 4
    %v424 = vand.u32 %v422, 15
    %v425 = vsub.s32 0, %v424
    %v426 = vsel %vm420, %v425, %v424
    %vm427 = vcmp.lt.s32.totalorder %v387, 0
    %v428 = vsub.s32 0, %v387
    %v429 = vsel %vm427, %v428, %v387
    %v430 = vshrl.u32 %v429, 4
    %v431 = vand.u32 %v429, 15
    %v432 = vsub.s32 0, %v431
    %v433 = vsel %vm427, %v432, %v431
    %vm434 = vcmp.lt.s32.totalorder %v388, 0
    %v435 = vsub.s32 0, %v388
    %v436 = vsel %vm434, %v435, %v388
    %v437 = vshrl.u32 %v436, 4
    %v438 = vand.u32 %v436, 15
    %v439 = vsub.s32 0, %v438
    %v440 = vsel %vm434, %v439, %v438
    %vm441 = vcmp.lt.s32.totalorder %v389, 0
    %v442 = vsub.s32 0, %v389
    %v443 = vsel %vm441, %v442, %v389
    %v444 = vshrl.u32 %v443, 4
    %v445 = vand.u32 %v443, 15
    %v446 = vsub.s32 0, %v445
    %v447 = vsel %vm441, %v446, %v445
    %vm448 = vcmp.lt.s32.totalorder %v390, 0
    %v449 = vsub.s32 0, %v390
    %v450 = vsel %vm448, %v449, %v390
    %v451 = vshrl.u32 %v450, 4
    %v452 = vand.u32 %v450, 15
    %v453 = vsub.s32 0, %v452
    %v454 = vsel %vm448, %v453, %v452
    %vm455 = vcmp.lt.s32.totalorder %v391, 0
    %v456 = vsub.s32 0, %v391
    %v457 = vsel %vm455, %v456, %v391
    %v458 = vshrl.u32 %v457, 4
    %v459 = vand.u32 %v457, 15
    %v460 = vsub.s32 0, %v459
    %v461 = vsel %vm455, %v460, %v459
    %vm462 = vcmp.lt.s32.totalorder %v392, 0
    %v463 = vsub.s32 0, %v392
    %v464 = vsel %vm462, %v463, %v392
    %v465 = vshrl.u32 %v464, 4
    %v466 = vand.u32 %v464, 15
    %v467 = vsub.s32 0, %v466
    %v468 = vsel %vm462, %v467, %v466
    %vm469 = vcmp.lt.s32.totalorder %v393, 0
    %v470 = vsub.s32 0, %v393
    %v471 = vsel %vm469, %v470, %v393
    %v472 = vshrl.u32 %v471, 4
    %v473 = vand.u32 %v471, 15
    %v474 = vsub.s32 0, %v473
    %v475 = vsel %vm469, %v474, %v473
    %vm476 = vcmp.lt.s32.totalorder %v394, 0
    %v477 = vsub.s32 0, %v394
    %v478 = vsel %vm476, %v477, %v394
    %v479 = vshrl.u32 %v478, 4
    %v480 = vand.u32 %v478, 15
    %v481 = vsub.s32 0, %v480
    %v482 = vsel %vm476, %v481, %v480
    %vm483 = vcmp.lt.s32.totalorder %v395, 0
    %v484 = vsub.s32 0, %v395
    %v485 = vsel %vm483, %v484, %v395
    %v486 = vshrl.u32 %v485, 4
    %v487 = vand.u32 %v485, 15
    %v488 = vsub.s32 0, %v487
    %v489 = vsel %vm483, %v488, %v487
    %vm490 = vcmp.lt.s32.totalorder %v396, 0
    %v491 = vsub.s32 0, %v396
    %v492 = vsel %vm490, %v491, %v396
    %v493 = vshrl.u32 %v492, 4
    %v494 = vand.u32 %v492, 15
    %v495 = vsub.s32 0, %v494
    %v496 = vsel %vm490, %v495, %v494
    %vm497 = vcmp.lt.s32.totalorder %v397, 0
    %v498 = vsub.s32 0, %v397
    %v499 = vsel %vm497, %v498, %v397
    %v500 = vshrl.u32 %v499, 4
    %v501 = vand.u32 %v499, 15
    %v502 = vsub.s32 0, %v501
    %v503 = vsel %vm497, %v502, %v501
    %vm504 = vcmp.lt.s32.totalorder %v398, 0
    %v505 = vsub.s32 0, %v398
    %v506 = vsel %vm504, %v505, %v398
    %v507 = vshrl.u32 %v506, 4
    %v508 = vand.u32 %v506, 15
    %v509 = vsub.s32 0, %v508
    %v510 = vsel %vm504, %v509, %v508
    %vm511 = vcmp.ne.s32.totalorder %v405, 0
    %vm512 = vcmp.ne.s32.totalorder %v412, 0
    %vm513 = vcmp.ne.s32.totalorder %v419, 0
    %vm514 = vcmp.ne.s32.totalorder %v426, 0
    %vm515 = vcmp.ne.s32.totalorder %v433, 0
    %vm516 = vcmp.ne.s32.totalorder %v440, 0
    %vm517 = vcmp.ne.s32.totalorder %v447, 0
    %vm518 = vcmp.ne.s32.totalorder %v454, 0
    %vm519 = vcmp.ne.s32.totalorder %v461, 0
    %vm520 = vcmp.ne.s32.totalorder %v468, 0
    %vm521 = vcmp.ne.s32.totalorder %v475, 0
    %vm522 = vcmp.ne.s32.totalorder %v482, 0
    %vm523 = vcmp.ne.s32.totalorder %v489, 0
    %vm524 = vcmp.ne.s32.totalorder %v496, 0
    %vm525 = vcmp.ne.s32.totalorder %v503, 0
    %vm526 = vcmp.ne.s32.totalorder %v510, 0
    %vm527 = vcmp.lt.s32.totalorder %v405, 0
    %vm528 = vcmp.lt.s32.totalorder %v412, 0
    %vm529 = vcmp.lt.s32.totalorder %v419, 0
    %vm530 = vcmp.lt.s32.totalorder %v426, 0
    %vm531 = vcmp.lt.s32.totalorder %v433, 0
    %vm532 = vcmp.lt.s32.totalorder %v440, 0
    %vm533 = vcmp.lt.s32.totalorder %v447, 0
    %vm534 = vcmp.lt.s32.totalorder %v454, 0
    %vm535 = vcmp.lt.s32.totalorder %v461, 0
    %vm536 = vcmp.lt.s32.totalorder %v468, 0
    %vm537 = vcmp.lt.s32.totalorder %v475, 0
    %vm538 = vcmp.lt.s32.totalorder %v482, 0
    %vm539 = vcmp.lt.s32.totalorder %v489, 0
    %vm540 = vcmp.lt.s32.totalorder %v496, 0
    %vm541 = vcmp.lt.s32.totalorder %v503, 0
    %vm542 = vcmp.lt.s32.totalorder %v510, 0
    %vm543 = vmand %vm527, %vm511
    %vm544 = vmand %vm528, %vm512
    %vm545 = vmand %vm529, %vm513
    %vm546 = vmand %vm530, %vm514
    %vm547 = vmand %vm531, %vm515
    %vm548 = vmand %vm532, %vm516
    %vm549 = vmand %vm533, %vm517
    %vm550 = vmand %vm534, %vm518
    %vm551 = vmand %vm535, %vm519
    %vm552 = vmand %vm536, %vm520
    %vm553 = vmand %vm537, %vm521
    %vm554 = vmand %vm538, %vm522
    %vm555 = vmand %vm539, %vm523
    %vm556 = vmand %vm540, %vm524
    %vm557 = vmand %vm541, %vm525
    %vm558 = vmand %vm542, %vm526
    %v559 = vadd.s32 %v405, 16
    %v560 = vadd.s32 %v412, 16
    %v561 = vadd.s32 %v419, 16
    %v562 = vadd.s32 %v426, 16
    %v563 = vadd.s32 %v433, 16
    %v564 = vadd.s32 %v440, 16
    %v565 = vadd.s32 %v447, 16
    %v566 = vadd.s32 %v454, 16
    %v567 = vadd.s32 %v461, 16
    %v568 = vadd.s32 %v468, 16
    %v569 = vadd.s32 %v475, 16
    %v570 = vadd.s32 %v482, 16
    %v571 = vadd.s32 %v489, 16
    %v572 = vadd.s32 %v496, 16
    %v573 = vadd.s32 %v503, 16
    %v574 = vadd.s32 %v510, 16
    %v575 = vsel %vm543, %v559, %v405
    %v576 = vsel %vm544, %v560, %v412
    %v577 = vsel %vm545, %v561, %v419
    %v578 = vsel %vm546, %v562, %v426
    %v579 = vsel %vm547, %v563, %v433
    %v580 = vsel %vm548, %v564, %v440
    %v581 = vsel %vm549, %v565, %v447
    %v582 = vsel %vm550, %v566, %v454
    %v583 = vsel %vm551, %v567, %v461
    %v584 = vsel %vm552, %v568, %v468
    %v585 = vsel %vm553, %v569, %v475
    %v586 = vsel %vm554, %v570, %v482
    %v587 = vsel %vm555, %v571, %v489
    %v588 = vsel %vm556, %v572, %v496
    %v589 = vsel %vm557, %v573, %v503
    %v590 = vsel %vm558, %v574, %v510
    %vm591 = vcmp.lt.s32.totalorder %v575, 15
    %vm592 = vcmp.lt.s32.totalorder %v576, 15
    %vm593 = vcmp.lt.s32.totalorder %v577, 15
    %vm594 = vcmp.lt.s32.totalorder %v578, 15
    %vm595 = vcmp.lt.s32.totalorder %v579, 15
    %vm596 = vcmp.lt.s32.totalorder %v580, 15
    %vm597 = vcmp.lt.s32.totalorder %v581, 15
    %vm598 = vcmp.lt.s32.totalorder %v582, 15
    %vm599 = vcmp.lt.s32.totalorder %v583, 15
    %vm600 = vcmp.lt.s32.totalorder %v584, 15
    %vm601 = vcmp.lt.s32.totalorder %v585, 15
    %vm602 = vcmp.lt.s32.totalorder %v586, 15
    %vm603 = vcmp.lt.s32.totalorder %v587, 15
    %vm604 = vcmp.lt.s32.totalorder %v588, 15
    %vm605 = vcmp.lt.s32.totalorder %v589, 15
    %vm606 = vcmp.lt.s32.totalorder %v590, 15
    %vm623 = vcmask 1046528
    %v624 = vrot.slane %v366, 1
    %v625 = vrot.slane %v367, 1
    %v626 = vsel %vm623, %v624, %v625
    %v627 = vrot.slane %v368, 1
    %v628 = vsel %vm623, %v625, %v627
    %v629 = vrot.slane %v369, 1
    %v630 = vsel %vm623, %v627, %v629
    %v631 = vrot.slane %v370, 1
    %v632 = vsel %vm623, %v629, %v631
    %v633 = vrot.slane %v371, 1
    %v634 = vsel %vm623, %v631, %v633
    %v635 = vrot.slane %v372, 1
    %v636 = vsel %vm623, %v633, %v635
    %v637 = vrot.slane %v373, 1
    %v638 = vsel %vm623, %v635, %v637
    %v639 = vrot.slane %v374, 1
    %v640 = vsel %vm623, %v637, %v639
    %v641 = vrot.slane %v375, 1
    %v642 = vsel %vm623, %v639, %v641
    %v643 = vrot.slane %v376, 1
    %v644 = vsel %vm623, %v641, %v643
    %v645 = vrot.slane %v377, 1
    %v646 = vsel %vm623, %v643, %v645
    %v647 = vrot.slane %v378, 1
    %v648 = vsel %vm623, %v645, %v647
    %v649 = vrot.slane %v379, 1
    %v650 = vsel %vm623, %v647, %v649
    %v651 = vrot.slane %v380, 1
    %v652 = vsel %vm623, %v649, %v651
    %v653 = vrot.slane %v381, 1
    %v654 = vsel %vm623, %v651, %v653
    %v671 = vsel %vm591, %v626, 0.0
    %v672 = vsel %vm592, %v628, 0.0
    %v673 = vsel %vm593, %v630, 0.0
    %v674 = vsel %vm594, %v632, 0.0
    %v675 = vsel %vm595, %v634, 0.0
    %v676 = vsel %vm596, %v636, 0.0
    %v677 = vsel %vm597, %v638, 0.0
    %v678 = vsel %vm598, %v640, 0.0
    %v679 = vsel %vm599, %v642, 0.0
    %v680 = vsel %vm600, %v644, 0.0
    %v681 = vsel %vm601, %v646, 0.0
    %v682 = vsel %vm602, %v648, 0.0
    %v683 = vsel %vm603, %v650, 0.0
    %v684 = vsel %vm604, %v652, 0.0
    %v685 = vsel %vm605, %v654, 0.0
    %v686 = vsel %vm606, %v653, 0.0
    %v687 = vmul.f32 %v671, %v671
    %v688 = vmul.f32 %v672, %v672
    %v689 = vmul.f32 %v673, %v673
    %v690 = vmul.f32 %v674, %v674
    %v691 = vmul.f32 %v675, %v675
    %v692 = vmul.f32 %v676, %v676
    %v693 = vmul.f32 %v677, %v677
    %v694 = vmul.f32 %v678, %v678
    %v695 = vmul.f32 %v679, %v679
    %v696 = vmul.f32 %v680, %v680
    %v697 = vmul.f32 %v681, %v681
    %v698 = vmul.f32 %v682, %v682
    %v699 = vmul.f32 %v683, %v683
    %v700 = vmul.f32 %v684, %v684
    %v701 = vmul.f32 %v685, %v685
    %v702 = vmul.f32 %v686, %v686
    %v703 = vsel %vm76, %v687, 0.0
    %v704 = vsel %vm76, %v688, 0.0
    %v705 = vadd.f32 %v703, %v704
    %v706 = vsel %vm76, %v689, 0.0
    %v707 = vadd.f32 %v705, %v706
    %v708 = vsel %vm76, %v690, 0.0
    %v709 = vadd.f32 %v707, %v708
    %v710 = vsel %vm76, %v691, 0.0
    %v711 = vadd.f32 %v709, %v710
    %v712 = vsel %vm76, %v692, 0.0
    %v713 = vadd.f32 %v711, %v712
    %v714 = vsel %vm76, %v693, 0.0
    %v715 = vadd.f32 %v713, %v714
    %v716 = vsel %vm76, %v694, 0.0
    %v717 = vadd.f32 %v715, %v716
    %v718 = vsel %vm76, %v695, 0.0
    %v719 = vadd.f32 %v717, %v718
    %v720 = vsel %vm76, %v696, 0.0
    %v721 = vadd.f32 %v719, %v720
    %v722 = vsel %vm76, %v697, 0.0
    %v723 = vadd.f32 %v721, %v722
    %v724 = vsel %vm76, %v698, 0.0
    %v725 = vadd.f32 %v723, %v724
    %v726 = vsel %vm76, %v699, 0.0
    %v727 = vadd.f32 %v725, %v726
    %v728 = vsel %vm76, %v700, 0.0
    %v729 = vadd.f32 %v727, %v728
    %v730 = vsel %vm76, %v701, 0.0
    %v731 = vadd.f32 %v729, %v730
    %vm732 = vcmask 129024
    %v733 = vsel %vm732, %v702, 0.0
    %v734 = vadd.f32 %v731, %v733
    %735 = vadd.xlane.f32.xlu0 %v734
    %v736 = vpop.xlane.xlu0 %735
    %v737 = vrot.slane %v736, 4
    %v738 = vadd.f32 %v736, %v737
    %v739 = vrot.slane %v738, 2
    %v740 = vadd.f32 %v738, %v739
    %v741 = vrot.slane %v740, 1
    %v742 = vadd.f32 %v740, %v741
    %s743 = vtos %v742
    %v744 = vlaneseq
    %v745 = vand.u32 %v744, 127
    %vm746 = vcmp.eq.s32.totalorder %v383, 0
    %vm747 = vcmp.eq.s32.totalorder %v745, 0
    %vm748 = vmand %vm746, %vm747
    %vm749 = vcmp.eq.s32.totalorder %v745, 1
    %vm750 = vmand %vm746, %vm749
    %vm751 = vcmp.eq.s32.totalorder %v745, 2
    %vm752 = vmand %vm746, %vm751
    %v753 = vstv %s743
    %v754 = vsel %vm752, %v753, 0.0
    %v755 = vstv %s317
    %v756 = vsel %vm750, %v755, %v754
    %v757 = vstv %s116
    %v758 = vsel %vm748, %v757, %v756
    %759 = vst [vmem:[#allocation2] sm:$0xff] %v758
    // Predicated region
    $region10: #{tpu_custom_call.1} parent=1 // pred_check
      _
    $region11: #{tpu_custom_call.1} parent=1 // pred_check_branch
      %761 = sbr.rel (0) target = $region13
    $region12: #{tpu_custom_call.1} parent=1 // pred_region
      %s763 = ssub.s32 128, 128
      %764 = vsyncadd [#allocation3], %s763
      %s766 = sshll.u32 [#allocation2], 4
      %s767 = int_to_ptr.vmem [resolvable:$true] %s766
      %769 = dma.vmem_to_hbm [thread:$0]  %s767, 128, %s2, [#allocation3]
    $region13: #{tpu_custom_call.1} parent=1 // pred_fallthru
      _
    // Predicated region
    $region14: #{tpu_custom_call.1} parent=1 // pred_check
      _
    $region15: #{tpu_custom_call.1} parent=1 // pred_check_branch
      %771 = sbr.rel (0) target = $region17
    $region16: #{tpu_custom_call.1} parent=1 // pred_region
      %772 = dma.done [#allocation3], 128
    $region17: #{tpu_custom_call.1} parent=1 // pred_fallthru
      _
    %773 = vsyncpa [#allocation3], 1

</llo_original>
